<compile_context>
chip_gen: v7x
topology: tpu7x:2x2x1
jax: 0.10.0
libtpu: 0.0.40
codegen_flags: <defaults>
</compile_context>

<pallas_src>
import functools

import jax
import jax.numpy as jnp
import numpy as np
from jax import lax
from jax.experimental import pallas as pl
from jax.experimental.pallas import tpu as pltpu


def _round_up(x, m):
    return ((x + m - 1) // m) * m


def _pick_tile_h(H, r, Wo, Cin, itemsize):
    """Largest divisor of H (capped at 16 rows) whose per-tile buffers stay small."""
    k_pad = _round_up(9 * Cin, 8)
    budget = 24 << 20
    divisors = [d for d in range(H, 0, -1)
                if H % d == 0 and (d == H or (d * r * Wo) % 128 == 0)]
    for d in divisors:
        if d > 16:
            continue
        per_tile = k_pad * d * Wo * itemsize + 2 * Cin * d * r * Wo * 4
        if per_tile <= budget:
            return d
    return divisors[-1] if divisors else H


def _conv3x3_shuffle_mish_kernel(x_ref, w_ref, b_ref, o_ref, p_ref, *,
                                 tile_h, Wo, r):
    """Fused 3x3 conv + bias + PixelShuffle + mish for one (batch, H-tile).

    x_ref: (1, 1, Cin, Lin_pad)   width-duplicated input tile with 1-row zero halo
                                  top/bottom, flattened over (tile_h+2, Wo),
                                  already in the MXU compute dtype.
    w_ref: (r, r*Cin, K_pad)      per-column-phase im2col weights; row = i*Cin + c,
                                  col = tap*Cin + cin (tap = kh*3+kw), zero tail pad.
    b_ref: (r, r*Cin, 1)          per-column-phase bias (float32).
    o_ref: (1, Cin, tile_h*r*Wo)  final pixel-shuffled output rows, flattened over
                                  (output rows of this tile, W*r); float32.
    p_ref: (K_pad, tile_h*Wo)     VMEM scratch: im2col patch matrix (compute dtype).
    """
    Cin = x_ref.shape[2]
    Lin = x_ref.shape[3]
    Lcol = tile_h * Wo
    K = 9 * Cin
    K_pad = p_ref.shape[0]
    cdt = p_ref.dtype

    xb = x_ref[0, 0]                                    # (Cin, Lin), compute dtype

    col = lax.broadcasted_iota(jnp.int32, (1, Lcol), 1)
    q = col % Wo                                        # duplicated-width position = w*r + j
    phase = col % r                                     # sub-pixel column phase j

    # im2col: the 9 taps are lane-rolls of the haloed, width-duplicated tile plus
    # width-border masks.  The conv's H zero padding is supplied by the halo rows,
    # so no dh masks are needed; roll wrap-around only lands on masked columns.
    pieces = []
    for kh in range(3):
        for kw in range(3):
            off = kh * Wo + (kw - 1) * r                # flat lane shift of this tap
            shift = (-off) % Lin
            v = xb if shift == 0 else pltpu.roll(xb, shift, 1)
            v = v[:, :Lcol]
            if kw == 0:
                v = jnp.where(q >= r, v, 0.0)
            elif kw == 2:
                v = jnp.where(q < Wo - r, v, 0.0)
            pieces.append(v)
    if K_pad != K:                                      # zero tail rows (their weights are 0)
        pieces.append(jnp.zeros((K_pad - K, Lcol), cdt))

    # Write the pieces into the scratch in sublane-aligned row groups.
    pending, pend_rows, row0 = [], 0, 0
    for v in pieces:
        pending.append(v)
        pend_rows += v.shape[0]
        if pend_rows % 8 == 0:
            blk = pending[0] if len(pending) == 1 else jnp.concatenate(pending, axis=0)
            p_ref[row0:row0 + pend_rows, :] = blk
            row0 += pend_rows
            pending, pend_rows = [], 0
    if pending:                                         # K_pad is a multiple of 8 -> unused
        blk = pending[0] if len(pending) == 1 else jnp.concatenate(pending, axis=0)
        p_ref[row0:row0 + pend_rows, :] = blk

    patches = p_ref[...]                                # (K_pad, Lcol), compute dtype

    # One MXU matmul per sub-pixel column phase; the lane phase-select fuses the
    # width half of PixelShuffle into the matmul outputs.  fp32 accumulation.
    acc = jnp.zeros((r * Cin, Lcol), jnp.float32)
    for j in range(r):
        aj = jnp.dot(w_ref[j], patches, preferred_element_type=jnp.float32)
        aj = aj + b_ref[j]
        acc = acc + jnp.where(phase == j, aj, 0.0)

    # mish(x) = x * tanh(softplus(x));  tanh(softplus(x)) = u/(u+2), u = t(t+2), t = e^x.
    # The x > 20 bypass matches torch's softplus threshold.  pl.reciprocal is exact.
    ex = jnp.exp(jnp.minimum(acc, 20.0))
    u = ex * (ex + 2.0)
    tanh_sp = jnp.where(acc > 20.0, 1.0, u * pl.reciprocal(u + 2.0))
    y = acc * tanh_sp                                   # (r*Cin, Lcol), fp32

    # Height half of PixelShuffle: sub-row i of input row h -> output row h*r + i.
    # Each store is a dense Wo-wide lane slab of the (1, Cin, tile_h*r*Wo) block.
    for i in range(r):
        yi = y[i * Cin:(i + 1) * Cin, :]
        for h in range(tile_h):
            o_ref[0, :, (h * r + i) * Wo:(h * r + i + 1) * Wo] = (
                yi[:, h * Wo:(h + 1) * Wo].astype(o_ref.dtype))


def upsample_block(x_nchw, weight_oihw, bias, up_scale, *,
                   mxu_bf16=True, tile_h=None):
    """Forward pass of UpsampleBLock (conv3x3 -> PixelShuffle -> mish).

    x_nchw:      (N, Cin, H, W)       float32
    weight_oihw: (Cout, Cin, 3, 3)    float32   (PyTorch conv weight layout)
    bias:        (Cout,)              float32
    returns:     (N, Cin, H*r, W*r)   float32   (same as the PyTorch NCHW output)

    mxu_bf16: bf16 MXU operands with fp32 accumulation (v6e/v7x fast path, default).
              Set False for the bit-accurate fp32 path.
    """
    N, Cin, H, W = x_nchw.shape
    r = int(up_scale)
    Cout = Cin * r * r
    Wo = W * r
    Ho = H * r
    assert weight_oihw.shape == (Cout, Cin, 3, 3)
    assert bias.shape == (Cout,)

    cdt = jnp.bfloat16 if mxu_bf16 else jnp.float32
    itemsize = 2 if mxu_bf16 else 4

    if tile_h is None:
        tile_h = _pick_tile_h(H, r, Wo, Cin, itemsize)
    assert H % tile_h == 0, "tile_h must divide H"
    nt = H // tile_h
    Lcol = tile_h * Wo                    # matmul columns per tile: (h, w*r+j)
    Lout = tile_h * r * Wo                # output lanes per tile:  (h*r+i, w*r+j)
    Lin = (tile_h + 2) * Wo               # input lanes per tile (1-row halo each side)
    Lin_pad = _round_up(Lin, 128)         # keep lane rolls on an aligned extent
    assert nt == 1 or Lout % 128 == 0, "output tile must be lane aligned"

    K = 9 * Cin
    K_pad = _round_up(K, 8)

    # Per-column-phase im2col weights:
    #   w_all[j, i*Cin + c, tap*Cin + cin] = weight[c*r^2 + i*r + j, cin, kh, kw].
    w6 = weight_oihw.reshape(Cin, r, r, Cin, 3, 3)          # (c, i, j, cin, kh, kw)
    w6 = jnp.transpose(w6, (2, 1, 0, 4, 5, 3))              # (j, i, c, kh, kw, cin)
    w_all = w6.reshape(r, r * Cin, K)
    if K_pad != K:
        w_all = jnp.pad(w_all, ((0, 0), (0, 0), (0, K_pad - K)))
    w_all = w_all.astype(cdt)

    b_all = jnp.transpose(bias.reshape(Cin, r, r), (2, 1, 0))   # (j, i, c)
    b_all = b_all.reshape(r, r * Cin, 1).astype(jnp.float32)

    # Cheap input-side prep in XLA (touches Cin channels, not Cin*r^2):
    # width duplication, 1-row zero halo, overlapping H-tile windows, lane pad.
    xr = jnp.repeat(x_nchw.astype(cdt), r, axis=3)              # (N, Cin, H, Wo)
    xp = jnp.pad(xr, ((0, 0), (0, 0), (1, 1), (0, 0)))          # (N, Cin, H+2, Wo)
    tiles = [xp[:, :, t * tile_h:t * tile_h + tile_h + 2, :] for t in range(nt)]
    x_prep = jnp.stack(tiles, axis=1).reshape(N, nt, Cin, Lin)
    if Lin_pad != Lin:
        x_prep = jnp.pad(x_prep, ((0, 0), (0, 0), (0, 0), (0, Lin_pad - Lin)))

    kernel = functools.partial(_conv3x3_shuffle_mish_kernel,
                               tile_h=tile_h, Wo=Wo, r=r)

    vmem_est = (2 * Cin * Lin_pad * itemsize          # input blocks (double buffered)
                + 2 * Cin * Lout * 4                  # output blocks (double buffered)
                + r * r * Cin * K_pad * itemsize      # weights (resident)
                + K_pad * Lcol * itemsize             # im2col scratch
                + 4 * r * Cin * Lcol * 4              # live fp32 matmul/mish values
                + (8 << 20))                          # headroom
    vmem_limit = int(min(max(vmem_est, 32 << 20), 96 << 20))

    out_flat = pl.pallas_call(
        kernel,
        out_shape=jax.ShapeDtypeStruct((N, Cin, Ho * Wo), jnp.float32),
        grid_spec=pltpu.PrefetchScalarGridSpec(
            num_scalar_prefetch=0,
            grid=(N, nt),
            in_specs=[
                pl.BlockSpec((1, 1, Cin, Lin_pad), lambda n, t: (n, t, 0, 0)),
                pl.BlockSpec((r, r * Cin, K_pad), lambda n, t: (0, 0, 0)),
                pl.BlockSpec((r, r * Cin, 1), lambda n, t: (0, 0, 0)),
            ],
            out_specs=pl.BlockSpec((1, Cin, Lout), lambda n, t: (n, 0, t)),
            scratch_shapes=[pltpu.VMEM((K_pad, Lcol), cdt)],
        ),
        compiler_params=pltpu.CompilerParams(
            dimension_semantics=("parallel", "parallel"),
            vmem_limit_bytes=vmem_limit,
        ),
        cost_estimate=pl.CostEstimate(
            flops=int(2 * N * r * (r * Cin) * K_pad * (H * Wo)),
            transcendentals=int(N * Cout * H * W),
            bytes_accessed=int(x_prep.size * itemsize
                               + N * Cin * Ho * Wo * 4
                               + w_all.size * itemsize),
        ),
    )(x_prep, w_all, b_all)

    # (N, Cin, Ho*Wo) -> (N, Cin, Ho, Wo) is a free (contiguous) reshape.
    return out_flat.reshape(N, Cin, Ho, Wo)


def _reference(x_nchw, weight_oihw, bias, up_scale):
    """Pure-JAX reference (conv -> pixel shuffle -> mish) for validation."""
    N, Cin, H, W = x_nchw.shape
    r = up_scale
    out = lax.conv_general_dilated(
        x_nchw, weight_oihw, window_strides=(1, 1), padding="SAME",
        dimension_numbers=("NCHW", "OIHW", "NCHW"),
    ) + bias.reshape(1, -1, 1, 1)
    out = out.reshape(N, Cin, r, r, H, W)
    out = jnp.transpose(out, (0, 1, 4, 2, 5, 3)).reshape(N, Cin, H * r, W * r)
    return out * jnp.tanh(jax.nn.softplus(out))


if __name__ == "__main__":
    # Small shapes consistent with the module: batch=2, in_channels=4,
    # spatial=16x16, up_scale=2  ->  conv out channels = 4*2^2 = 16.
    N, Cin, H, W = 2, 4, 16, 16
    up_scale = 2
    Cout = Cin * up_scale ** 2

    key = jax.random.PRNGKey(0)
    kx, kw, kb = jax.random.split(key, 3)

    x = jax.random.normal(kx, (N, Cin, H, W), dtype=jnp.float32)

    # Deterministic conv parameter init (uniform, PyTorch-style fan-in scale).
    fan_in = Cin * 3 * 3
    bound = 1.0 / np.sqrt(fan_in)
    weight_oihw = jax.random.uniform(
        kw, (Cout, Cin, 3, 3), minval=-bound, maxval=bound, dtype=jnp.float32)
    bias = jax.random.uniform(
        kb, (Cout,), minval=-bound, maxval=bound, dtype=jnp.float32)

    ref = jax.block_until_ready(_reference(x, weight_oihw, bias, up_scale))

    # fp32 MXU path with 2 H-tiles (exercises the tiled, halo'd grid): exact check.
    out = jax.block_until_ready(
        upsample_block(x, weight_oihw, bias, up_scale, mxu_bf16=False, tile_h=8))
    assert out.shape == (N, Cin, H * up_scale, W * up_scale)
    np.testing.assert_allclose(np.asarray(out), np.asarray(ref),
                               rtol=1e-4, atol=1e-4)

    # Default path: bf16 MXU operands with fp32 accumulation (v6e/v7x fast path).
    out_bf16 = jax.block_until_ready(
        upsample_block(x, weight_oihw, bias, up_scale))
    np.testing.assert_allclose(np.asarray(out_bf16), np.asarray(ref),
                               rtol=2e-2, atol=1e-2)

    print("KERNEL_OK")
</pallas_src>

<mosaic_0001>
module attributes {stable_mosaic.version = 11 : i64} {
  func.func @_conv3x3_shuffle_mish_kernel(%arg0: i32, %arg1: i32, %arg2: memref<1x1x4x384xf32, #tpu.memory_space<vmem>>, %arg3: memref<2x8x40xf32, #tpu.memory_space<vmem>>, %arg4: memref<2x8x1xf32, #tpu.memory_space<vmem>>, %arg5: memref<1x4x512xf32, #tpu.memory_space<vmem>>, %arg6: memref<40x256xf32, #tpu.memory_space<vmem>>) attributes {dimension_semantics = [#tpu.dimension_semantics<parallel>, #tpu.dimension_semantics<parallel>], iteration_bounds = array<i64: 2, 2>, scalar_prefetch = 0 : i64, scratch_operands = 1 : i64, tpu.core_type = #tpu.core_type<tc>, window_params = [{transform_indices = @transform_0, window_bounds = array<i64: 1, 1, 4, 384>}, {pipeline_mode = #tpu.pipeline_mode<synchronous>, transform_indices = @transform_1, window_bounds = array<i64: 2, 8, 40>}, {pipeline_mode = #tpu.pipeline_mode<synchronous>, transform_indices = @transform_2, window_bounds = array<i64: 2, 8, 1>}, {transform_indices = @transform_3, window_bounds = array<i64: 1, 4, 512>}]} {
    %c0 = arith.constant 0 : index
    %c0_0 = arith.constant 0 : index
    %c0_1 = arith.constant 0 : index
    %c0_2 = arith.constant 0 : index
    %0 = vector.load %arg2[%c0, %c0_0, %c0_1, %c0_2] : memref<1x1x4x384xf32, #tpu.memory_space<vmem>>, vector<1x1x4x384xf32>
    %1 = vector.shape_cast %0 : vector<1x1x4x384xf32> to vector<4x384xf32>
    %2 = tpu.iota {dimensions = array<i32: 1>} : vector<1x256xi32>
    %c32_i32 = arith.constant 32 : i32
    %c0_i32 = arith.constant 0 : i32
    %3 = arith.cmpi eq, %c32_i32, %c0_i32 : i32
    %c1_i32 = arith.constant 1 : i32
    %4 = arith.select %3, %c1_i32, %c32_i32 : i32
    %5 = vector.broadcast %4 : i32 to vector<1x256xi32>
    %6 = arith.remsi %2, %5 : vector<1x256xi32>
    %c0_i32_3 = arith.constant 0 : i32
    %7 = vector.broadcast %c0_i32_3 : i32 to vector<1x256xi32>
    %8 = arith.cmpi ne, %6, %7 : vector<1x256xi32>
    %c0_i32_4 = arith.constant 0 : i32
    %9 = vector.broadcast %c0_i32_4 : i32 to vector<1x256xi32>
    %10 = arith.cmpi slt, %6, %9 : vector<1x256xi32>
    %c0_i32_5 = arith.constant 0 : i32
    %11 = arith.cmpi slt, %4, %c0_i32_5 : i32
    %12 = vector.broadcast %11 : i1 to vector<1x256xi1>
    %13 = vector.broadcast %12 : vector<1x256xi1> to vector<1x256xi1>
    %14 = arith.xori %10, %13 : vector<1x256xi1>
    %15 = arith.andi %14, %8 : vector<1x256xi1>
    %16 = vector.broadcast %4 : i32 to vector<1x256xi32>
    %17 = arith.addi %6, %16 : vector<1x256xi32>
    %18 = arith.select %15, %17, %6 : vector<1x256xi1>, vector<1x256xi32>
    %c2_i32 = arith.constant 2 : i32
    %c0_i32_6 = arith.constant 0 : i32
    %19 = arith.cmpi eq, %c2_i32, %c0_i32_6 : i32
    %c1_i32_7 = arith.constant 1 : i32
    %20 = arith.select %19, %c1_i32_7, %c2_i32 : i32
    %21 = vector.broadcast %20 : i32 to vector<1x256xi32>
    %22 = arith.remsi %2, %21 : vector<1x256xi32>
    %c0_i32_8 = arith.constant 0 : i32
    %23 = vector.broadcast %c0_i32_8 : i32 to vector<1x256xi32>
    %24 = arith.cmpi ne, %22, %23 : vector<1x256xi32>
    %c0_i32_9 = arith.constant 0 : i32
    %25 = vector.broadcast %c0_i32_9 : i32 to vector<1x256xi32>
    %26 = arith.cmpi slt, %22, %25 : vector<1x256xi32>
    %c0_i32_10 = arith.constant 0 : i32
    %27 = arith.cmpi slt, %20, %c0_i32_10 : i32
    %28 = vector.broadcast %27 : i1 to vector<1x256xi1>
    %29 = vector.broadcast %28 : vector<1x256xi1> to vector<1x256xi1>
    %30 = arith.xori %26, %29 : vector<1x256xi1>
    %31 = arith.andi %30, %24 : vector<1x256xi1>
    %32 = vector.broadcast %20 : i32 to vector<1x256xi32>
    %33 = arith.addi %22, %32 : vector<1x256xi32>
    %34 = arith.select %31, %33, %22 : vector<1x256xi1>, vector<1x256xi32>
    %c2_i32_11 = arith.constant 2 : i32
    %35 = tpu.dynamic_rotate %1 by %c2_i32_11 dim 1 : vector<4x384xf32>, i32 -> vector<4x384xf32>
    %36 = vector.extract_strided_slice %35 {offsets = [0, 0], sizes = [4, 256], strides = [1, 1]} : vector<4x384xf32> to vector<4x256xf32>
    %c2_i32_12 = arith.constant 2 : i32
    %37 = vector.broadcast %c2_i32_12 : i32 to vector<1x256xi32>
    %38 = arith.cmpi sge, %18, %37 : vector<1x256xi32>
    %cst = arith.constant 0.000000e+00 : f32
    %39 = vector.shape_cast %38 : vector<1x256xi1> to vector<1x256xi1>
    %40 = vector.broadcast %39 : vector<1x256xi1> to vector<4x256xi1>
    %41 = vector.broadcast %cst : f32 to vector<4x256xf32>
    %42 = arith.select %40, %36, %41 : vector<4x256xi1>, vector<4x256xf32>
    %43 = vector.extract_strided_slice %1 {offsets = [0, 0], sizes = [4, 256], strides = [1, 1]} : vector<4x384xf32> to vector<4x256xf32>
    %c382_i32 = arith.constant 382 : i32
    %44 = tpu.dynamic_rotate %1 by %c382_i32 dim 1 : vector<4x384xf32>, i32 -> vector<4x384xf32>
    %45 = vector.extract_strided_slice %44 {offsets = [0, 0], sizes = [4, 256], strides = [1, 1]} : vector<4x384xf32> to vector<4x256xf32>
    %c30_i32 = arith.constant 30 : i32
    %46 = vector.broadcast %c30_i32 : i32 to vector<1x256xi32>
    %47 = arith.cmpi slt, %18, %46 : vector<1x256xi32>
    %cst_13 = arith.constant 0.000000e+00 : f32
    %48 = vector.shape_cast %47 : vector<1x256xi1> to vector<1x256xi1>
    %49 = vector.broadcast %48 : vector<1x256xi1> to vector<4x256xi1>
    %50 = vector.broadcast %cst_13 : f32 to vector<4x256xf32>
    %51 = arith.select %49, %45, %50 : vector<4x256xi1>, vector<4x256xf32>
    %c354_i32 = arith.constant 354 : i32
    %52 = tpu.dynamic_rotate %1 by %c354_i32 dim 1 : vector<4x384xf32>, i32 -> vector<4x384xf32>
    %53 = vector.extract_strided_slice %52 {offsets = [0, 0], sizes = [4, 256], strides = [1, 1]} : vector<4x384xf32> to vector<4x256xf32>
    %c2_i32_14 = arith.constant 2 : i32
    %54 = vector.broadcast %c2_i32_14 : i32 to vector<1x256xi32>
    %55 = arith.cmpi sge, %18, %54 : vector<1x256xi32>
    %cst_15 = arith.constant 0.000000e+00 : f32
    %56 = vector.shape_cast %55 : vector<1x256xi1> to vector<1x256xi1>
    %57 = vector.broadcast %56 : vector<1x256xi1> to vector<4x256xi1>
    %58 = vector.broadcast %cst_15 : f32 to vector<4x256xf32>
    %59 = arith.select %57, %53, %58 : vector<4x256xi1>, vector<4x256xf32>
    %c352_i32 = arith.constant 352 : i32
    %60 = tpu.dynamic_rotate %1 by %c352_i32 dim 1 : vector<4x384xf32>, i32 -> vector<4x384xf32>
    %61 = vector.extract_strided_slice %60 {offsets = [0, 0], sizes = [4, 256], strides = [1, 1]} : vector<4x384xf32> to vector<4x256xf32>
    %c350_i32 = arith.constant 350 : i32
    %62 = tpu.dynamic_rotate %1 by %c350_i32 dim 1 : vector<4x384xf32>, i32 -> vector<4x384xf32>
    %63 = vector.extract_strided_slice %62 {offsets = [0, 0], sizes = [4, 256], strides = [1, 1]} : vector<4x384xf32> to vector<4x256xf32>
    %c30_i32_16 = arith.constant 30 : i32
    %64 = vector.broadcast %c30_i32_16 : i32 to vector<1x256xi32>
    %65 = arith.cmpi slt, %18, %64 : vector<1x256xi32>
    %cst_17 = arith.constant 0.000000e+00 : f32
    %66 = vector.shape_cast %65 : vector<1x256xi1> to vector<1x256xi1>
    %67 = vector.broadcast %66 : vector<1x256xi1> to vector<4x256xi1>
    %68 = vector.broadcast %cst_17 : f32 to vector<4x256xf32>
    %69 = arith.select %67, %63, %68 : vector<4x256xi1>, vector<4x256xf32>
    %c322_i32 = arith.constant 322 : i32
    %70 = tpu.dynamic_rotate %1 by %c322_i32 dim 1 : vector<4x384xf32>, i32 -> vector<4x384xf32>
    %71 = vector.extract_strided_slice %70 {offsets = [0, 0], sizes = [4, 256], strides = [1, 1]} : vector<4x384xf32> to vector<4x256xf32>
    %c2_i32_18 = arith.constant 2 : i32
    %72 = vector.broadcast %c2_i32_18 : i32 to vector<1x256xi32>
    %73 = arith.cmpi sge, %18, %72 : vector<1x256xi32>
    %cst_19 = arith.constant 0.000000e+00 : f32
    %74 = vector.shape_cast %73 : vector<1x256xi1> to vector<1x256xi1>
    %75 = vector.broadcast %74 : vector<1x256xi1> to vector<4x256xi1>
    %76 = vector.broadcast %cst_19 : f32 to vector<4x256xf32>
    %77 = arith.select %75, %71, %76 : vector<4x256xi1>, vector<4x256xf32>
    %c320_i32 = arith.constant 320 : i32
    %78 = tpu.dynamic_rotate %1 by %c320_i32 dim 1 : vector<4x384xf32>, i32 -> vector<4x384xf32>
    %79 = vector.extract_strided_slice %78 {offsets = [0, 0], sizes = [4, 256], strides = [1, 1]} : vector<4x384xf32> to vector<4x256xf32>
    %c318_i32 = arith.constant 318 : i32
    %80 = tpu.dynamic_rotate %1 by %c318_i32 dim 1 : vector<4x384xf32>, i32 -> vector<4x384xf32>
    %81 = vector.extract_strided_slice %80 {offsets = [0, 0], sizes = [4, 256], strides = [1, 1]} : vector<4x384xf32> to vector<4x256xf32>
    %c30_i32_20 = arith.constant 30 : i32
    %82 = vector.broadcast %c30_i32_20 : i32 to vector<1x256xi32>
    %83 = arith.cmpi slt, %18, %82 : vector<1x256xi32>
    %cst_21 = arith.constant 0.000000e+00 : f32
    %84 = vector.shape_cast %83 : vector<1x256xi1> to vector<1x256xi1>
    %85 = vector.broadcast %84 : vector<1x256xi1> to vector<4x256xi1>
    %86 = vector.broadcast %cst_21 : f32 to vector<4x256xf32>
    %87 = arith.select %85, %81, %86 : vector<4x256xi1>, vector<4x256xf32>
    %cst_22 = arith.constant 0.000000e+00 : f32
    %88 = vector.broadcast %cst_22 : f32 to vector<4x256xf32>
    %89 = tpu.concatenate %42, %43 in 0 : vector<4x256xf32>, vector<4x256xf32> -> vector<8x256xf32>
    %c0_23 = arith.constant 0 : index
    %c0_24 = arith.constant 0 : index
    %90 = vector.load %arg6[%c0_23, %c0_24] : memref<40x256xf32, #tpu.memory_space<vmem>>, vector<8x256xf32>
    tpu.vector_store %arg6[%c0_23, %c0_24], %89 {strides = array<i32>} : memref<40x256xf32, #tpu.memory_space<vmem>>, vector<8x256xf32>,
    %91 = tpu.concatenate %51, %59 in 0 : vector<4x256xf32>, vector<4x256xf32> -> vector<8x256xf32>
    %c8 = arith.constant 8 : index
    %c0_25 = arith.constant 0 : index
    %92 = vector.load %arg6[%c8, %c0_25] : memref<40x256xf32, #tpu.memory_space<vmem>>, vector<8x256xf32>
    tpu.vector_store %arg6[%c8, %c0_25], %91 {strides = array<i32>} : memref<40x256xf32, #tpu.memory_space<vmem>>, vector<8x256xf32>,
    %93 = tpu.concatenate %61, %69 in 0 : vector<4x256xf32>, vector<4x256xf32> -> vector<8x256xf32>
    %c16 = arith.constant 16 : index
    %c0_26 = arith.constant 0 : index
    %94 = vector.load %arg6[%c16, %c0_26] : memref<40x256xf32, #tpu.memory_space<vmem>>, vector<8x256xf32>
    tpu.vector_store %arg6[%c16, %c0_26], %93 {strides = array<i32>} : memref<40x256xf32, #tpu.memory_space<vmem>>, vector<8x256xf32>,
    %95 = tpu.concatenate %77, %79 in 0 : vector<4x256xf32>, vector<4x256xf32> -> vector<8x256xf32>
    %c24 = arith.constant 24 : index
    %c0_27 = arith.constant 0 : index
    %96 = vector.load %arg6[%c24, %c0_27] : memref<40x256xf32, #tpu.memory_space<vmem>>, vector<8x256xf32>
    tpu.vector_store %arg6[%c24, %c0_27], %95 {strides = array<i32>} : memref<40x256xf32, #tpu.memory_space<vmem>>, vector<8x256xf32>,
    %97 = tpu.concatenate %87, %88 in 0 : vector<4x256xf32>, vector<4x256xf32> -> vector<8x256xf32>
    %c32 = arith.constant 32 : index
    %c0_28 = arith.constant 0 : index
    %98 = vector.load %arg6[%c32, %c0_28] : memref<40x256xf32, #tpu.memory_space<vmem>>, vector<8x256xf32>
    tpu.vector_store %arg6[%c32, %c0_28], %97 {strides = array<i32>} : memref<40x256xf32, #tpu.memory_space<vmem>>, vector<8x256xf32>,
    %c0_29 = arith.constant 0 : index
    %c0_30 = arith.constant 0 : index
    %99 = vector.load %arg6[%c0_29, %c0_30] : memref<40x256xf32, #tpu.memory_space<vmem>>, vector<40x256xf32>
    %cst_31 = arith.constant 0.000000e+00 : f32
    %100 = vector.broadcast %cst_31 : f32 to vector<8x256xf32>
    %c0_32 = arith.constant 0 : index
    %c0_33 = arith.constant 0 : index
    %c0_34 = arith.constant 0 : index
    %101 = vector.load %arg3[%c0_32, %c0_33, %c0_34] : memref<2x8x40xf32, #tpu.memory_space<vmem>>, vector<1x8x40xf32>
    %102 = vector.shape_cast %101 : vector<1x8x40xf32> to vector<8x40xf32>
    %cst_35 = arith.constant dense<0.000000e+00> : vector<8x256xf32>
    %103 = tpu.matmul %102, %99, %cst_35 {dimension_numbers = #tpu.dot_dimension_numbers<[1], [0], [0], [1], [0, 0, 1, 1], [], []>} : vector<8x40xf32>, vector<40x256xf32>, vector<8x256xf32> -> vector<8x256xf32>
    %c0_36 = arith.constant 0 : index
    %c0_37 = arith.constant 0 : index
    %c0_38 = arith.constant 0 : index
    %104 = vector.load %arg4[%c0_36, %c0_37, %c0_38] : memref<2x8x1xf32, #tpu.memory_space<vmem>>, vector<1x8x1xf32>
    %105 = vector.shape_cast %104 : vector<1x8x1xf32> to vector<8x1xf32>
    %106 = vector.broadcast %105 : vector<8x1xf32> to vector<8x256xf32>
    %107 = arith.addf %103, %106 : vector<8x256xf32>
    %c0_i32_39 = arith.constant 0 : i32
    %108 = vector.broadcast %c0_i32_39 : i32 to vector<1x256xi32>
    %109 = arith.cmpi eq, %34, %108 : vector<1x256xi32>
    %cst_40 = arith.constant 0.000000e+00 : f32
    %110 = vector.shape_cast %109 : vector<1x256xi1> to vector<1x256xi1>
    %111 = vector.broadcast %110 : vector<1x256xi1> to vector<8x256xi1>
    %112 = vector.broadcast %cst_40 : f32 to vector<8x256xf32>
    %113 = arith.select %111, %107, %112 : vector<8x256xi1>, vector<8x256xf32>
    %114 = arith.addf %100, %113 : vector<8x256xf32>
    %c1 = arith.constant 1 : index
    %c0_41 = arith.constant 0 : index
    %c0_42 = arith.constant 0 : index
    %115 = vector.load %arg3[%c1, %c0_41, %c0_42] : memref<2x8x40xf32, #tpu.memory_space<vmem>>, vector<1x8x40xf32>
    %116 = vector.shape_cast %115 : vector<1x8x40xf32> to vector<8x40xf32>
    %cst_43 = arith.constant dense<0.000000e+00> : vector<8x256xf32>
    %117 = tpu.matmul %116, %99, %cst_43 {dimension_numbers = #tpu.dot_dimension_numbers<[1], [0], [0], [1], [0, 0, 1, 1], [], []>} : vector<8x40xf32>, vector<40x256xf32>, vector<8x256xf32> -> vector<8x256xf32>
    %c1_44 = arith.constant 1 : index
    %c0_45 = arith.constant 0 : index
    %c0_46 = arith.constant 0 : index
    %118 = vector.load %arg4[%c1_44, %c0_45, %c0_46] : memref<2x8x1xf32, #tpu.memory_space<vmem>>, vector<1x8x1xf32>
    %119 = vector.shape_cast %118 : vector<1x8x1xf32> to vector<8x1xf32>
    %120 = vector.broadcast %119 : vector<8x1xf32> to vector<8x256xf32>
    %121 = arith.addf %117, %120 : vector<8x256xf32>
    %c1_i32_47 = arith.constant 1 : i32
    %122 = vector.broadcast %c1_i32_47 : i32 to vector<1x256xi32>
    %123 = arith.cmpi eq, %34, %122 : vector<1x256xi32>
    %cst_48 = arith.constant 0.000000e+00 : f32
    %124 = vector.shape_cast %123 : vector<1x256xi1> to vector<1x256xi1>
    %125 = vector.broadcast %124 : vector<1x256xi1> to vector<8x256xi1>
    %126 = vector.broadcast %cst_48 : f32 to vector<8x256xf32>
    %127 = arith.select %125, %121, %126 : vector<8x256xi1>, vector<8x256xf32>
    %128 = arith.addf %114, %127 : vector<8x256xf32>
    %cst_49 = arith.constant 2.000000e+01 : f32
    %129 = vector.broadcast %cst_49 : f32 to vector<8x256xf32>
    %130 = arith.minimumf %128, %129 : vector<8x256xf32>
    %131 = math.exp %130 : vector<8x256xf32>
    %cst_50 = arith.constant 2.000000e+00 : f32
    %132 = vector.broadcast %cst_50 : f32 to vector<8x256xf32>
    %133 = arith.addf %131, %132 : vector<8x256xf32>
    %134 = arith.mulf %131, %133 : vector<8x256xf32>
    %cst_51 = arith.constant 2.000000e+01 : f32
    %135 = vector.broadcast %cst_51 : f32 to vector<8x256xf32>
    %136 = arith.cmpf ogt, %128, %135 : vector<8x256xf32>
    %cst_52 = arith.constant 2.000000e+00 : f32
    %137 = vector.broadcast %cst_52 : f32 to vector<8x256xf32>
    %138 = arith.addf %134, %137 : vector<8x256xf32>
    %139 = tpu.reciprocal %138 : vector<8x256xf32> -> vector<8x256xf32>
    %140 = arith.mulf %134, %139 : vector<8x256xf32>
    %cst_53 = arith.constant 1.000000e+00 : f32
    %141 = vector.broadcast %cst_53 : f32 to vector<8x256xf32>
    %142 = arith.select %136, %141, %140 : vector<8x256xi1>, vector<8x256xf32>
    %143 = arith.mulf %128, %142 : vector<8x256xf32>
    %144 = vector.extract_strided_slice %143 {offsets = [0, 0], sizes = [4, 256], strides = [1, 1]} : vector<8x256xf32> to vector<4x256xf32>
    %145 = vector.extract_strided_slice %144 {offsets = [0, 0], sizes = [4, 32], strides = [1, 1]} : vector<4x256xf32> to vector<4x32xf32>
    %c0_54 = arith.constant 0 : index
    %c0_55 = arith.constant 0 : index
    %c0_56 = arith.constant 0 : index
    %146 = vector.load %arg5[%c0_54, %c0_55, %c0_56] : memref<1x4x512xf32, #tpu.memory_space<vmem>>, vector<1x4x32xf32>
    %147 = vector.shape_cast %146 : vector<1x4x32xf32> to vector<4x32xf32>
    %148 = vector.shape_cast %145 : vector<4x32xf32> to vector<1x4x32xf32>
    tpu.vector_store %arg5[%c0_54, %c0_55, %c0_56], %148 {strides = array<i32>} : memref<1x4x512xf32, #tpu.memory_space<vmem>>, vector<1x4x32xf32>,
    %149 = vector.extract_strided_slice %144 {offsets = [0, 32], sizes = [4, 32], strides = [1, 1]} : vector<4x256xf32> to vector<4x32xf32>
    %c0_57 = arith.constant 0 : index
    %c0_58 = arith.constant 0 : index
    %c64 = arith.constant 64 : index
    %150 = vector.load %arg5[%c0_57, %c0_58, %c64] : memref<1x4x512xf32, #tpu.memory_space<vmem>>, vector<1x4x32xf32>
    %151 = vector.shape_cast %150 : vector<1x4x32xf32> to vector<4x32xf32>
    %152 = vector.shape_cast %149 : vector<4x32xf32> to vector<1x4x32xf32>
    tpu.vector_store %arg5[%c0_57, %c0_58, %c64], %152 {strides = array<i32>} : memref<1x4x512xf32, #tpu.memory_space<vmem>>, vector<1x4x32xf32>,
    %153 = vector.extract_strided_slice %144 {offsets = [0, 64], sizes = [4, 32], strides = [1, 1]} : vector<4x256xf32> to vector<4x32xf32>
    %c0_59 = arith.constant 0 : index
    %c0_60 = arith.constant 0 : index
    %c128 = arith.constant 128 : index
    %154 = vector.load %arg5[%c0_59, %c0_60, %c128] : memref<1x4x512xf32, #tpu.memory_space<vmem>>, vector<1x4x32xf32>
    %155 = vector.shape_cast %154 : vector<1x4x32xf32> to vector<4x32xf32>
    %156 = vector.shape_cast %153 : vector<4x32xf32> to vector<1x4x32xf32>
    tpu.vector_store %arg5[%c0_59, %c0_60, %c128], %156 {strides = array<i32>} : memref<1x4x512xf32, #tpu.memory_space<vmem>>, vector<1x4x32xf32>,
    %157 = vector.extract_strided_slice %144 {offsets = [0, 96], sizes = [4, 32], strides = [1, 1]} : vector<4x256xf32> to vector<4x32xf32>
    %c0_61 = arith.constant 0 : index
    %c0_62 = arith.constant 0 : index
    %c192 = arith.constant 192 : index
    %158 = vector.load %arg5[%c0_61, %c0_62, %c192] : memref<1x4x512xf32, #tpu.memory_space<vmem>>, vector<1x4x32xf32>
    %159 = vector.shape_cast %158 : vector<1x4x32xf32> to vector<4x32xf32>
    %160 = vector.shape_cast %157 : vector<4x32xf32> to vector<1x4x32xf32>
    tpu.vector_store %arg5[%c0_61, %c0_62, %c192], %160 {strides = array<i32>} : memref<1x4x512xf32, #tpu.memory_space<vmem>>, vector<1x4x32xf32>,
    %161 = vector.extract_strided_slice %144 {offsets = [0, 128], sizes = [4, 32], strides = [1, 1]} : vector<4x256xf32> to vector<4x32xf32>
    %c0_63 = arith.constant 0 : index
    %c0_64 = arith.constant 0 : index
    %c256 = arith.constant 256 : index
    %162 = vector.load %arg5[%c0_63, %c0_64, %c256] : memref<1x4x512xf32, #tpu.memory_space<vmem>>, vector<1x4x32xf32>
    %163 = vector.shape_cast %162 : vector<1x4x32xf32> to vector<4x32xf32>
    %164 = vector.shape_cast %161 : vector<4x32xf32> to vector<1x4x32xf32>
    tpu.vector_store %arg5[%c0_63, %c0_64, %c256], %164 {strides = array<i32>} : memref<1x4x512xf32, #tpu.memory_space<vmem>>, vector<1x4x32xf32>,
    %165 = vector.extract_strided_slice %144 {offsets = [0, 160], sizes = [4, 32], strides = [1, 1]} : vector<4x256xf32> to vector<4x32xf32>
    %c0_65 = arith.constant 0 : index
    %c0_66 = arith.constant 0 : index
    %c320 = arith.constant 320 : index
    %166 = vector.load %arg5[%c0_65, %c0_66, %c320] : memref<1x4x512xf32, #tpu.memory_space<vmem>>, vector<1x4x32xf32>
    %167 = vector.shape_cast %166 : vector<1x4x32xf32> to vector<4x32xf32>
    %168 = vector.shape_cast %165 : vector<4x32xf32> to vector<1x4x32xf32>
    tpu.vector_store %arg5[%c0_65, %c0_66, %c320], %168 {strides = array<i32>} : memref<1x4x512xf32, #tpu.memory_space<vmem>>, vector<1x4x32xf32>,
    %169 = vector.extract_strided_slice %144 {offsets = [0, 192], sizes = [4, 32], strides = [1, 1]} : vector<4x256xf32> to vector<4x32xf32>
    %c0_67 = arith.constant 0 : index
    %c0_68 = arith.constant 0 : index
    %c384 = arith.constant 384 : index
    %170 = vector.load %arg5[%c0_67, %c0_68, %c384] : memref<1x4x512xf32, #tpu.memory_space<vmem>>, vector<1x4x32xf32>
    %171 = vector.shape_cast %170 : vector<1x4x32xf32> to vector<4x32xf32>
    %172 = vector.shape_cast %169 : vector<4x32xf32> to vector<1x4x32xf32>
    tpu.vector_store %arg5[%c0_67, %c0_68, %c384], %172 {strides = array<i32>} : memref<1x4x512xf32, #tpu.memory_space<vmem>>, vector<1x4x32xf32>,
    %173 = vector.extract_strided_slice %144 {offsets = [0, 224], sizes = [4, 32], strides = [1, 1]} : vector<4x256xf32> to vector<4x32xf32>
    %c0_69 = arith.constant 0 : index
    %c0_70 = arith.constant 0 : index
    %c448 = arith.constant 448 : index
    %174 = vector.load %arg5[%c0_69, %c0_70, %c448] : memref<1x4x512xf32, #tpu.memory_space<vmem>>, vector<1x4x32xf32>
    %175 = vector.shape_cast %174 : vector<1x4x32xf32> to vector<4x32xf32>
    %176 = vector.shape_cast %173 : vector<4x32xf32> to vector<1x4x32xf32>
    tpu.vector_store %arg5[%c0_69, %c0_70, %c448], %176 {strides = array<i32>} : memref<1x4x512xf32, #tpu.memory_space<vmem>>, vector<1x4x32xf32>,
    %177 = vector.extract_strided_slice %143 {offsets = [4, 0], sizes = [4, 256], strides = [1, 1]} : vector<8x256xf32> to vector<4x256xf32>
    %178 = vector.extract_strided_slice %177 {offsets = [0, 0], sizes = [4, 32], strides = [1, 1]} : vector<4x256xf32> to vector<4x32xf32>
    %c0_71 = arith.constant 0 : index
    %c0_72 = arith.constant 0 : index
    %c32_73 = arith.constant 32 : index
    %179 = vector.load %arg5[%c0_71, %c0_72, %c32_73] : memref<1x4x512xf32, #tpu.memory_space<vmem>>, vector<1x4x32xf32>
    %180 = vector.shape_cast %179 : vector<1x4x32xf32> to vector<4x32xf32>
    %181 = vector.shape_cast %178 : vector<4x32xf32> to vector<1x4x32xf32>
    tpu.vector_store %arg5[%c0_71, %c0_72, %c32_73], %181 {strides = array<i32>} : memref<1x4x512xf32, #tpu.memory_space<vmem>>, vector<1x4x32xf32>,
    %182 = vector.extract_strided_slice %177 {offsets = [0, 32], sizes = [4, 32], strides = [1, 1]} : vector<4x256xf32> to vector<4x32xf32>
    %c0_74 = arith.constant 0 : index
    %c0_75 = arith.constant 0 : index
    %c96 = arith.constant 96 : index
    %183 = vector.load %arg5[%c0_74, %c0_75, %c96] : memref<1x4x512xf32, #tpu.memory_space<vmem>>, vector<1x4x32xf32>
    %184 = vector.shape_cast %183 : vector<1x4x32xf32> to vector<4x32xf32>
    %185 = vector.shape_cast %182 : vector<4x32xf32> to vector<1x4x32xf32>
    tpu.vector_store %arg5[%c0_74, %c0_75, %c96], %185 {strides = array<i32>} : memref<1x4x512xf32, #tpu.memory_space<vmem>>, vector<1x4x32xf32>,
    %186 = vector.extract_strided_slice %177 {offsets = [0, 64], sizes = [4, 32], strides = [1, 1]} : vector<4x256xf32> to vector<4x32xf32>
    %c0_76 = arith.constant 0 : index
    %c0_77 = arith.constant 0 : index
    %c160 = arith.constant 160 : index
    %187 = vector.load %arg5[%c0_76, %c0_77, %c160] : memref<1x4x512xf32, #tpu.memory_space<vmem>>, vector<1x4x32xf32>
    %188 = vector.shape_cast %187 : vector<1x4x32xf32> to vector<4x32xf32>
    %189 = vector.shape_cast %186 : vector<4x32xf32> to vector<1x4x32xf32>
    tpu.vector_store %arg5[%c0_76, %c0_77, %c160], %189 {strides = array<i32>} : memref<1x4x512xf32, #tpu.memory_space<vmem>>, vector<1x4x32xf32>,
    %190 = vector.extract_strided_slice %177 {offsets = [0, 96], sizes = [4, 32], strides = [1, 1]} : vector<4x256xf32> to vector<4x32xf32>
    %c0_78 = arith.constant 0 : index
    %c0_79 = arith.constant 0 : index
    %c224 = arith.constant 224 : index
    %191 = vector.load %arg5[%c0_78, %c0_79, %c224] : memref<1x4x512xf32, #tpu.memory_space<vmem>>, vector<1x4x32xf32>
    %192 = vector.shape_cast %191 : vector<1x4x32xf32> to vector<4x32xf32>
    %193 = vector.shape_cast %190 : vector<4x32xf32> to vector<1x4x32xf32>
    tpu.vector_store %arg5[%c0_78, %c0_79, %c224], %193 {strides = array<i32>} : memref<1x4x512xf32, #tpu.memory_space<vmem>>, vector<1x4x32xf32>,
    %194 = vector.extract_strided_slice %177 {offsets = [0, 128], sizes = [4, 32], strides = [1, 1]} : vector<4x256xf32> to vector<4x32xf32>
    %c0_80 = arith.constant 0 : index
    %c0_81 = arith.constant 0 : index
    %c288 = arith.constant 288 : index
    %195 = vector.load %arg5[%c0_80, %c0_81, %c288] : memref<1x4x512xf32, #tpu.memory_space<vmem>>, vector<1x4x32xf32>
    %196 = vector.shape_cast %195 : vector<1x4x32xf32> to vector<4x32xf32>
    %197 = vector.shape_cast %194 : vector<4x32xf32> to vector<1x4x32xf32>
    tpu.vector_store %arg5[%c0_80, %c0_81, %c288], %197 {strides = array<i32>} : memref<1x4x512xf32, #tpu.memory_space<vmem>>, vector<1x4x32xf32>,
    %198 = vector.extract_strided_slice %177 {offsets = [0, 160], sizes = [4, 32], strides = [1, 1]} : vector<4x256xf32> to vector<4x32xf32>
    %c0_82 = arith.constant 0 : index
    %c0_83 = arith.constant 0 : index
    %c352 = arith.constant 352 : index
    %199 = vector.load %arg5[%c0_82, %c0_83, %c352] : memref<1x4x512xf32, #tpu.memory_space<vmem>>, vector<1x4x32xf32>
    %200 = vector.shape_cast %199 : vector<1x4x32xf32> to vector<4x32xf32>
    %201 = vector.shape_cast %198 : vector<4x32xf32> to vector<1x4x32xf32>
    tpu.vector_store %arg5[%c0_82, %c0_83, %c352], %201 {strides = array<i32>} : memref<1x4x512xf32, #tpu.memory_space<vmem>>, vector<1x4x32xf32>,
    %202 = vector.extract_strided_slice %177 {offsets = [0, 192], sizes = [4, 32], strides = [1, 1]} : vector<4x256xf32> to vector<4x32xf32>
    %c0_84 = arith.constant 0 : index
    %c0_85 = arith.constant 0 : index
    %c416 = arith.constant 416 : index
    %203 = vector.load %arg5[%c0_84, %c0_85, %c416] : memref<1x4x512xf32, #tpu.memory_space<vmem>>, vector<1x4x32xf32>
    %204 = vector.shape_cast %203 : vector<1x4x32xf32> to vector<4x32xf32>
    %205 = vector.shape_cast %202 : vector<4x32xf32> to vector<1x4x32xf32>
    tpu.vector_store %arg5[%c0_84, %c0_85, %c416], %205 {strides = array<i32>} : memref<1x4x512xf32, #tpu.memory_space<vmem>>, vector<1x4x32xf32>,
    %206 = vector.extract_strided_slice %177 {offsets = [0, 224], sizes = [4, 32], strides = [1, 1]} : vector<4x256xf32> to vector<4x32xf32>
    %c0_86 = arith.constant 0 : index
    %c0_87 = arith.constant 0 : index
    %c480 = arith.constant 480 : index
    %207 = vector.load %arg5[%c0_86, %c0_87, %c480] : memref<1x4x512xf32, #tpu.memory_space<vmem>>, vector<1x4x32xf32>
    %208 = vector.shape_cast %207 : vector<1x4x32xf32> to vector<4x32xf32>
    %209 = vector.shape_cast %206 : vector<4x32xf32> to vector<1x4x32xf32>
    tpu.vector_store %arg5[%c0_86, %c0_87, %c480], %209 {strides = array<i32>} : memref<1x4x512xf32, #tpu.memory_space<vmem>>, vector<1x4x32xf32>,
    return
  }
  func.func @transform_0(%arg0: i32, %arg1: i32) -> (i32, i32, i32, i32) {
    %c0_i32 = arith.constant 0 : i32
    %c0_i32_0 = arith.constant 0 : i32
    %c0_i32_1 = arith.constant 0 : i32
    return %arg0, %arg1, %c0_i32, %c0_i32_0 : i32, i32, i32, i32
  }
  func.func @transform_1(%arg0: i32, %arg1: i32) -> (i32, i32, i32) {
    %c0_i32 = arith.constant 0 : i32
    %c0_i32_0 = arith.constant 0 : i32
    %c0_i32_1 = arith.constant 0 : i32
    %c0_i32_2 = arith.constant 0 : i32
    return %c0_i32, %c0_i32_0, %c0_i32_1 : i32, i32, i32
  }
  func.func @transform_2(%arg0: i32, %arg1: i32) -> (i32, i32, i32) {
    %c0_i32 = arith.constant 0 : i32
    %c0_i32_0 = arith.constant 0 : i32
    %c0_i32_1 = arith.constant 0 : i32
    %c0_i32_2 = arith.constant 0 : i32
    return %c0_i32, %c0_i32_0, %c0_i32_1 : i32, i32, i32
  }
  func.func @transform_3(%arg0: i32, %arg1: i32) -> (i32, i32, i32) {
    %c0_i32 = arith.constant 0 : i32
    %c0_i32_0 = arith.constant 0 : i32
    return %arg0, %c0_i32, %arg1 : i32, i32, i32
  }
}

</mosaic_0001>

<llo_original>
// kernel: tpu_custom_call.1
$region0: #{tpu_custom_call.1}
  #allocation0 [shape = 'u32[]', space=smem, size = 0x4, offset = 0x4, fixed_abs, tag = 'smem constant byte address 0x4 - core index']
  #allocation1 [shape = 'u32[144,128]{1,0:T(1,128)}', space=vmem, size = 0x12000, scoped, tag = 'internal scratch']
  #allocation2 [shape = 'f32[40,256]{1,0:T(8,128)}', space=vmem, size = 0xa000, scoped, tag = 'scratch operand']
  %s0 = inlined_call_operand.hbm [shape: f32[2,2,4,384], index: 0, kind: input, shape index: {}]
  %s1 = inlined_call_operand.vmem [shape: f32[2,8,40], index: 1, kind: input, shape index: {}]
  %s2 = inlined_call_operand.vmem [shape: f32[2,8,1], index: 2, kind: input, shape index: {}]
  %s3 = inlined_call_operand.hbm [shape: f32[2,4,1024], index: 3, kind: output, shape index: {}]
  %s4 = sld [smem:[#allocation0]]
  $region49: #{tpu_custom_call.1} parent=0
    _
  %s6 = ssub.s32 1, %s4
  %s7 = scalar_select 0, %s6, %s4
  $region1: #{tpu_custom_call.1} parent=0
    #allocation3 [shape = 'u8[12288]{0}', space=vmem, size = 0x3000, scoped, tag = 'input window, operand 0']
    #allocation4 [shape = 's32[2]{0}', space=sflag, size = 0x8, scoped, tag = 'scoped memory for tpu_custom_call.1']
    #allocation5 [shape = 's32[2]{0}', space=sflag, size = 0x8, scoped, tag = 'scoped memory for tpu_custom_call.1']
    #allocation6 [shape = 'u8[16384]{0}', space=vmem, size = 0x4000, scoped, tag = 'output window, operand 0']
    %8 = vsyncpa [#allocation4], 0
    %s9 = scalar_lea.sflag [#allocation4], 1
    %10 = vsyncpa %s9, 0
    %11 = vsyncpa [#allocation5], 0
    %s12 = scalar_lea.sflag [#allocation5], 1
    %13 = vsyncpa %s12, 0
    loop: start=0, step=1, limit=6
    $region2: #{tpu_custom_call.1} parent=1 // loop_pre_header
      _
    $region3: #{tpu_custom_call.1} parent=1 // loop_header
      %s15 = sphi 0, %s19
      %p16 = scmp.ge.s32.totalorder %s15, 6
      %s22 = sphi 0, %s34
      %s23 = sphi 0, %s30
      %s24 = sphi 0, %s22
      %s25 = sphi 0, %s23
      %s26 = sphi 0, %s24
      %s27 = sphi 0, %s25
      %s39 = sphi 0, %s41
      %s42 = sphi 0, %s39
      %s43 = sphi 0, %s42
      %s59 = sphi 0, %s43
      %s63 = sphi 0, %s63
      %s65 = sphi 0, %s63
      %s66 = sphi 0, %s65
      %s80 = sphi 0, %s66
      %s84 = sphi 0, %s84
      %s86 = sphi 0, %s84
      %s87 = sphi 0, %s86
      %s101 = sphi 0, %s87
      %s109 = sphi 0, %s111
      %s112 = sphi 0, %s109
      %s113 = sphi 0, %s112
      %s129 = sphi 0, %s113
    $region4: #{tpu_custom_call.1} parent=1 // loop_header_branch
      %18 = sbr.rel (%p16) target = $region8
    $region5: #{tpu_custom_call.1} parent=1 // loop_body
      %s20 = ssub.s32 %s15, 1
      %s21 = ssub.s32 %s15, 2
      %s28 = sadd.s32 1, %s23
      %p29 = scmp.ge.s32.totalorder %s28, 2
      %s30 = scalar_select %p29, 0, %s28
      %s31 = sadd.s32 1, %s22
      %s32 = scalar_select %p29, %s31, %s22
      %p33 = scmp.ge.s32.totalorder %s32, 2
      %s34 = scalar_select %p33, 0, %s32
      %s35 = ssub.s32 %s22, %s34
      %s36 = ssub.s32 %s23, %s30
      %s37 = sor.u32 %s35, %s36
      %p38 = scmp.eq.s32.totalorder %s37, 0
      %s40 = sadd.s32 %s39, 1
      %s41 = scalar_select %p38, %s39, %s40
      %p44 = pneg %p38
      %p45 = scmp.eq.s32.totalorder %s15, 3
      %p46 = por %p44, %p45
      %p47 = scmp.ne.s32.totalorder %s39, %s42
      %p48 = scmp.eq.s32.totalorder %s15, 0
      %p49 = por %p47, %p48
      %p50 = scmp.ne.s32.totalorder %s39, %s42
      %p51 = scmp.eq.s32.totalorder %s20, 3
      %p52 = por %p50, %p51
      %p53 = scmp.ne.s32.totalorder %s42, %s43
      %p54 = scmp.eq.s32.totalorder %s20, 0
      %p55 = por %p53, %p54
      %p56 = scmp.ne.s32.totalorder %s42, %s43
      %p57 = scmp.eq.s32.totalorder %s21, 3
      %p58 = por %p56, %p57
      %p60 = scmp.ne.s32.totalorder %s43, %s59
      %p61 = scmp.eq.s32.totalorder %s21, 0
      %p62 = por %p60, %p61
      %s64 = sadd.s32 %s63, 1
      %p67 = scmp.eq.s32.totalorder %s15, 3
      %p68 = scmp.ne.s32.totalorder %s63, %s65
      %p69 = scmp.eq.s32.totalorder %s15, 0
      %p70 = por %p68, %p69
      %p71 = scmp.ne.s32.totalorder %s63, %s65
      %p72 = scmp.eq.s32.totalorder %s20, 3
      %p73 = por %p71, %p72
      %p74 = scmp.ne.s32.totalorder %s65, %s66
      %p75 = scmp.eq.s32.totalorder %s20, 0
      %p76 = por %p74, %p75
      %p77 = scmp.ne.s32.totalorder %s65, %s66
      %p78 = scmp.eq.s32.totalorder %s21, 3
      %p79 = por %p77, %p78
      %p81 = scmp.ne.s32.totalorder %s66, %s80
      %p82 = scmp.eq.s32.totalorder %s21, 0
      %p83 = por %p81, %p82
      %s85 = sadd.s32 %s84, 1
      %p88 = scmp.eq.s32.totalorder %s15, 3
      %p89 = scmp.ne.s32.totalorder %s84, %s86
      %p90 = scmp.eq.s32.totalorder %s15, 0
      %p91 = por %p89, %p90
      %p92 = scmp.ne.s32.totalorder %s84, %s86
      %p93 = scmp.eq.s32.totalorder %s20, 3
      %p94 = por %p92, %p93
      %p95 = scmp.ne.s32.totalorder %s86, %s87
      %p96 = scmp.eq.s32.totalorder %s20, 0
      %p97 = por %p95, %p96
      %p98 = scmp.ne.s32.totalorder %s86, %s87
      %p99 = scmp.eq.s32.totalorder %s21, 3
      %p100 = por %p98, %p99
      %p102 = scmp.ne.s32.totalorder %s87, %s101
      %p103 = scmp.eq.s32.totalorder %s21, 0
      %p104 = por %p102, %p103
      %s105 = ssub.s32 %s22, %s34
      %s106 = ssub.s32 %s23, %s30
      %s107 = sor.u32 %s105, %s106
      %p108 = scmp.eq.s32.totalorder %s107, 0
      %s110 = sadd.s32 %s109, 1
      %s111 = scalar_select %p108, %s109, %s110
      %p114 = pneg %p108
      %p115 = scmp.eq.s32.totalorder %s15, 3
      %p116 = por %p114, %p115
      %p117 = scmp.ne.s32.totalorder %s109, %s112
      %p118 = scmp.eq.s32.totalorder %s15, 0
      %p119 = por %p117, %p118
      %p120 = scmp.ne.s32.totalorder %s109, %s112
      %p121 = scmp.eq.s32.totalorder %s20, 3
      %p122 = por %p120, %p121
      %p123 = scmp.ne.s32.totalorder %s112, %s113
      %p124 = scmp.eq.s32.totalorder %s20, 0
      %p125 = por %p123, %p124
      %p126 = scmp.ne.s32.totalorder %s112, %s113
      %p127 = scmp.eq.s32.totalorder %s21, 3
      %p128 = por %p126, %p127
      %p130 = scmp.ne.s32.totalorder %s113, %s129
      %p131 = scmp.eq.s32.totalorder %s21, 0
      %p132 = por %p130, %p131
      %p133 = scmp.le.s32.totalorder 1, %s15
      %p134 = scmp.lt.s32.totalorder %s15, 5
      %p135 = pnand %p133, %p134
      %p136 = pneg %p135
      // Predicated region
      $region9: #{tpu_custom_call.1} parent=5 // pred_check
        _
      $region10: #{tpu_custom_call.1} parent=5 // pred_check_branch
        %138 = sbr.rel (%p135) target = $region12
      $region11: #{tpu_custom_call.1} parent=5 // pred_region
        %s139 = ssub.s32 %s15, 1
        // Predicated region
        $region13: #{tpu_custom_call.1} parent=11 // pred_check
          %p140 = pneg %p76
        $region14: #{tpu_custom_call.1} parent=11 // pred_check_branch
          %142 = sbr.rel (%p140) target = $region16
        $region15: #{tpu_custom_call.1} parent=11 // pred_region
          _
        $region16: #{tpu_custom_call.1} parent=11 // pred_fallthru
          _
        // Predicated region
        $region17: #{tpu_custom_call.1} parent=11 // pred_check
          %p143 = pneg %p97
        $region18: #{tpu_custom_call.1} parent=11 // pred_check_branch
          %145 = sbr.rel (%p143) target = $region20
        $region19: #{tpu_custom_call.1} parent=11 // pred_region
          _
        $region20: #{tpu_custom_call.1} parent=11 // pred_fallthru
          _
      $region12: #{tpu_custom_call.1} parent=5 // pred_fallthru
        _
      %p146 = scmp.lt.s32.totalorder %s15, 4
      // Predicated region
      $region21: #{tpu_custom_call.1} parent=5 // pred_check
        %p147 = pneg %p146
      $region22: #{tpu_custom_call.1} parent=5 // pred_check_branch
        %149 = sbr.rel (%p147) target = $region24
      $region23: #{tpu_custom_call.1} parent=5 // pred_region
        // Predicated region
        $region25: #{tpu_custom_call.1} parent=23 // pred_check
          %p150 = pneg %p49
        $region26: #{tpu_custom_call.1} parent=23 // pred_check_branch
          %152 = sbr.rel (%p150) target = $region28
        $region27: #{tpu_custom_call.1} parent=23 // pred_region
          %s153 = sand.u32 %s39, 1
          %s154 = scalar_lea.sflag [#allocation4], %s153
          %s155 = sand.u32 %s39, 1
          %s156 = smul.addr %s155, 12
          %s157 = scalar_lea.vmem [#allocation3], %s156
          %s159 = ssub.s32 192, 192
          %160 = vsyncadd %s154, %s159
          %s161 = smul.addr %s23, 3
          %s162 = smul.addr %s22, 6
          %s163 = sadd.s32 %s161, %s162
          %s164 = smul.addr %s163, 64
          %s165 = scalar_lea.hbm %s0, %s164
          %s167 = sshll.u32 %s157, 4
          %s168 = int_to_ptr.vmem [resolvable:$true] %s167
          %170 = dma.hbm_to_vmem [thread:$0]  %s165, 192, %s168, %s154
        $region28: #{tpu_custom_call.1} parent=23 // pred_fallthru
          _
      $region24: #{tpu_custom_call.1} parent=5 // pred_fallthru
        _
      %p171 = scmp.le.s32.totalorder 1, %s15
      %p172 = scmp.lt.s32.totalorder %s15, 5
      %p173 = pnand %p171, %p172
      %p174 = pneg %p173
      // Predicated region
      $region29: #{tpu_custom_call.1} parent=5 // pred_check
        _
      $region30: #{tpu_custom_call.1} parent=5 // pred_check_branch
        %176 = sbr.rel (%p173) target = $region32
      $region31: #{tpu_custom_call.1} parent=5 // pred_region
        %s177 = ssub.s32 %s15, 1
        %s178 = sand.u32 %s42, 1
        %s179 = scalar_lea.sflag [#allocation4], %s178
        %s180 = sand.u32 %s42, 1
        %s181 = smul.addr %s180, 12
        %s182 = scalar_lea.vmem [#allocation3], %s181
        // Predicated region
        $region33: #{tpu_custom_call.1} parent=31 // pred_check
          %p183 = pneg %p55
        $region34: #{tpu_custom_call.1} parent=31 // pred_check_branch
          %185 = sbr.rel (%p183) target = $region36
        $region35: #{tpu_custom_call.1} parent=31 // pred_region
          %186 = dma.done %s179, 192
        $region36: #{tpu_custom_call.1} parent=31 // pred_fallthru
          _
        %s187 = sand.u32 %s42, 1
        %s188 = scalar_lea.sflag [#allocation4], %s187
        %s189 = sand.u32 %s42, 1
        %s190 = smul.addr %s189, 12
        %s191 = scalar_lea.vmem [#allocation3], %s190
        %p192 = pneg %p55
        %p193 = pneg %p52
        %p194 = pneg %p76
        %p195 = pneg %p73
        %p196 = pneg %p97
        %p197 = pneg %p94
        %p198 = pneg %p125
        %p199 = pneg %p122
        %s200 = sand.u32 %s112, 1
        %s201 = scalar_lea.sflag [#allocation5], %s200
        %s202 = sand.u32 %s112, 1
        %s203 = smul.addr %s202, 16
        %s204 = scalar_lea.vmem [#allocation6], %s203
        %s205 = smul.u32 4, %s25
        %v206 = vld [vmem:[%s182] sm:$0xff]
        %v207 = vld [vmem:[%s182 + $0x8] sm:$0xf]
        %v208 = vlaneseq
        %v209 = vand.u32 %v208, 127
        %v210 = vadd.s32 %v209, 128
        %vm211 = vcmp.lt.s32.totalorder %v209, 0
        %v212 = vsub.s32 0, %v209
        %v213 = vsel %vm211, %v212, %v209
        %v214 = vshrl.u32 %v213, 5
        %v215 = vand.u32 %v213, 31
        %v216 = vsub.s32 0, %v215
        %v217 = vsel %vm211, %v216, %v215
        %vm218 = vcmp.lt.s32.totalorder %v210, 0
        %v219 = vsub.s32 0, %v210
        %v220 = vsel %vm218, %v219, %v210
        %v221 = vshrl.u32 %v220, 5
        %v222 = vand.u32 %v220, 31
        %v223 = vsub.s32 0, %v222
        %v224 = vsel %vm218, %v223, %v222
        %vm225 = vcmp.ne.s32.totalorder %v217, 0
        %vm226 = vcmp.ne.s32.totalorder %v224, 0
        %vm227 = vcmp.lt.s32.totalorder %v217, 0
        %vm228 = vcmp.lt.s32.totalorder %v224, 0
        %vm229 = vmand %vm227, %vm225
        %vm230 = vmand %vm228, %vm226
        %v231 = vadd.s32 %v217, 32
        %v232 = vadd.s32 %v224, 32
        %v233 = vsel %vm229, %v231, %v217
        %v234 = vsel %vm230, %v232, %v224
        %vm235 = vcmp.lt.s32.totalorder %v209, 0
        %v236 = vsub.s32 0, %v209
        %v237 = vsel %vm235, %v236, %v209
        %v238 = vshrl.u32 %v237, 1
        %v239 = vand.u32 %v237, 1
        %v240 = vsub.s32 0, %v239
        %v241 = vsel %vm235, %v240, %v239
        %vm242 = vcmp.lt.s32.totalorder %v210, 0
        %v243 = vsub.s32 0, %v210
        %v244 = vsel %vm242, %v243, %v210
        %v245 = vshrl.u32 %v244, 1
        %v246 = vand.u32 %v244, 1
        %v247 = vsub.s32 0, %v246
        %v248 = vsel %vm242, %v247, %v246
        %vm249 = vcmp.ne.s32.totalorder %v241, 0
        %vm250 = vcmp.ne.s32.totalorder %v248, 0
        %vm251 = vcmp.lt.s32.totalorder %v241, 0
        %vm252 = vcmp.lt.s32.totalorder %v248, 0
        %vm253 = vmand %vm251, %vm249
        %vm254 = vmand %vm252, %vm250
        %v255 = vadd.s32 %v241, 2
        %v256 = vadd.s32 %v248, 2
        %v257 = vsel %vm253, %v255, %v241
        %v258 = vsel %vm254, %v256, %v248
        %v260 = vcombine.high %v206, %v206
        %262 = vrot.lane.b32.xlu0 %v206, 2
        %v263 = vpop.permute.xlu0 %262
        %264 = vrot.lane.b32.xlu0 %v260, 2
        %v265 = vpop.permute.xlu0 %264
        %266 = vrot.lane.b32.xlu0 %v207, 2
        %v267 = vpop.permute.xlu0 %266
        %vm268 = vcmp.lt.s32.totalorder %v209, 2
        %v269 = vsel %vm268, %v263, %v265
        %v270 = vsel %vm268, %v267, %v263
        %vm271 = vcmp.ge.s32.totalorder %v233, 2
        %vm272 = vcmp.ge.s32.totalorder %v234, 2
        %v273 = vsel %vm271, 1, 0
        %v274 = vsel %vm272, 1, 0
        %vm275 = vcmp.eq.s32.totalorder %v273, 1
        %vm276 = vcmp.eq.s32.totalorder %v274, 1
        %v277 = vsel %vm275, %v270, 0.0
        %v278 = vsel %vm276, %v269, 0.0
        %279 = vrot.lane.b32.xlu0 %v206, 126
        %v280 = vpop.permute.xlu0 %279
        %281 = vrot.lane.b32.xlu0 %v260, 126
        %v282 = vpop.permute.xlu0 %281
        %283 = vrot.lane.b32.xlu0 %v207, 126
        %v284 = vpop.permute.xlu0 %283
        %vm285 = vcmp.lt.s32.totalorder %v209, 126
        %v286 = vsel %vm285, %v282, %v284
        %v287 = vsel %vm285, %v280, %v282
        %vm288 = vcmp.lt.s32.totalorder %v233, 30
        %vm289 = vcmp.lt.s32.totalorder %v234, 30
        %v290 = vsel %vm288, 1, 0
        %v291 = vsel %vm289, 1, 0
        %vm292 = vcmp.eq.s32.totalorder %v290, 1
        %vm293 = vcmp.eq.s32.totalorder %v291, 1
        %v294 = vsel %vm292, %v287, 0.0
        %v295 = vsel %vm293, %v286, 0.0
        %296 = vrot.lane.b32.xlu0 %v206, 98
        %v297 = vpop.permute.xlu0 %296
        %298 = vrot.lane.b32.xlu0 %v260, 98
        %v299 = vpop.permute.xlu0 %298
        %300 = vrot.lane.b32.xlu0 %v207, 98
        %v301 = vpop.permute.xlu0 %300
        %vm302 = vcmp.lt.s32.totalorder %v209, 98
        %v303 = vsel %vm302, %v299, %v301
        %v304 = vsel %vm302, %v297, %v299
        %v305 = vsel %vm275, %v304, 0.0
        %v306 = vsel %vm276, %v303, 0.0
        %307 = vrot.lane.b32.xlu0 %v206, 96
        %v308 = vpop.permute.xlu0 %307
        %309 = vrot.lane.b32.xlu0 %v260, 96
        %v310 = vpop.permute.xlu0 %309
        %311 = vrot.lane.b32.xlu0 %v207, 96
        %v312 = vpop.permute.xlu0 %311
        %vm313 = vcmp.lt.s32.totalorder %v209, 96
        %v314 = vsel %vm313, %v310, %v312
        %v315 = vsel %vm313, %v308, %v310
        %316 = vrot.lane.b32.xlu0 %v206, 94
        %v317 = vpop.permute.xlu0 %316
        %318 = vrot.lane.b32.xlu0 %v260, 94
        %v319 = vpop.permute.xlu0 %318
        %320 = vrot.lane.b32.xlu0 %v207, 94
        %v321 = vpop.permute.xlu0 %320
        %vm322 = vcmp.lt.s32.totalorder %v209, 94
        %v323 = vsel %vm322, %v319, %v321
        %v324 = vsel %vm322, %v317, %v319
        %v325 = vsel %vm292, %v324, 0.0
        %v326 = vsel %vm293, %v323, 0.0
        %327 = vrot.lane.b32.xlu0 %v206, 66
        %v328 = vpop.permute.xlu0 %327
        %329 = vrot.lane.b32.xlu0 %v260, 66
        %v330 = vpop.permute.xlu0 %329
        %331 = vrot.lane.b32.xlu0 %v207, 66
        %v332 = vpop.permute.xlu0 %331
        %vm333 = vcmp.lt.s32.totalorder %v209, 66
        %v334 = vsel %vm333, %v330, %v332
        %v335 = vsel %vm333, %v328, %v330
        %v336 = vsel %vm275, %v335, 0.0
        %v337 = vsel %vm276, %v334, 0.0
        %338 = vrot.lane.b32.xlu0 %v206, 64
        %v339 = vpop.permute.xlu0 %338
        %340 = vrot.lane.b32.xlu0 %v260, 64
        %v341 = vpop.permute.xlu0 %340
        %342 = vrot.lane.b32.xlu0 %v207, 64
        %v343 = vpop.permute.xlu0 %342
        %vm344 = vcmp.lt.s32.totalorder %v209, 64
        %v345 = vsel %vm344, %v341, %v343
        %v346 = vsel %vm344, %v339, %v341
        %347 = vrot.lane.b32.xlu0 %v206, 62
        %v348 = vpop.permute.xlu0 %347
        %349 = vrot.lane.b32.xlu0 %v260, 62
        %v350 = vpop.permute.xlu0 %349
        %351 = vrot.lane.b32.xlu0 %v207, 62
        %v352 = vpop.permute.xlu0 %351
        %vm353 = vcmp.lt.s32.totalorder %v209, 62
        %v354 = vsel %vm353, %v350, %v352
        %v355 = vsel %vm353, %v348, %v350
        %v356 = vsel %vm292, %v355, 0.0
        %v357 = vsel %vm293, %v354, 0.0
        %v358 = vcombine.low %v206, %v206
        %vm360 = vcmask 1043456
        %v361 = vsel %vm360, %v277, %v358
        %v362 = vsel %vm360, %v278, %v206
        %363 = vst [vmem:[#allocation2] sm:$0xff] %v361
        %364 = vst [vmem:[#allocation2 + $0x8] sm:$0xff] %v362
        %v367 = vrot.slane %v305, 4
        %v368 = vrot.slane %v306, 4
        %v371 = vsel %vm360, %v294, %v367
        %v372 = vsel %vm360, %v295, %v368
        %373 = vst [vmem:[#allocation2 + $0x10] sm:$0xff] %v371
        %374 = vst [vmem:[#allocation2 + $0x18] sm:$0xff] %v372
        %v377 = vrot.slane %v325, 4
        %v378 = vrot.slane %v326, 4
        %v381 = vsel %vm360, %v315, %v377
        %v382 = vsel %vm360, %v314, %v378
        %383 = vst [vmem:[#allocation2 + $0x20] sm:$0xff] %v381
        %384 = vst [vmem:[#allocation2 + $0x28] sm:$0xff] %v382
        %v387 = vrot.slane %v346, 4
        %v388 = vrot.slane %v345, 4
        %v391 = vsel %vm360, %v336, %v387
        %v392 = vsel %vm360, %v337, %v388
        %393 = vst [vmem:[#allocation2 + $0x30] sm:$0xff] %v391
        %394 = vst [vmem:[#allocation2 + $0x38] sm:$0xff] %v392
        %v395 = vsel %vm360, %v356, 0.0
        %v396 = vsel %vm360, %v357, 0.0
        %397 = vst [vmem:[#allocation2 + $0x40] sm:$0xff] %v395
        %398 = vst [vmem:[#allocation2 + $0x48] sm:$0xff] %v396
        %v399 = vld [vmem:[#allocation2] sm:$0xff]
        %v400 = vld [vmem:[#allocation2 + $0x8] sm:$0xff]
        %v401 = vld [vmem:[#allocation2 + $0x10] sm:$0xff]
        %v402 = vld [vmem:[#allocation2 + $0x18] sm:$0xff]
        %v403 = vld [vmem:[#allocation2 + $0x20] sm:$0xff]
        %v404 = vld [vmem:[#allocation2 + $0x28] sm:$0xff]
        %v405 = vld [vmem:[#allocation2 + $0x30] sm:$0xff]
        %v406 = vld [vmem:[#allocation2 + $0x38] sm:$0xff]
        %v407 = vld [vmem:[#allocation2 + $0x40] sm:$0xff]
        %v408 = vld [vmem:[#allocation2 + $0x48] sm:$0xff]
        %v409 = vld [vmem:[%s1] sm:$0xff]
        %v410 = vld [vmem:[%s2] sm:$0xff]
        %412 = vset.pattern.permute.xlu0 0
        %413 = vperm.xlu0 %412, %v410
        %v414 = vpop.permute.xlu0 %413
        %vm416 = vcmask 326656
        %v418 = vsel %vm416, %v409, 0
        %420 = vmatprep.subr.mxu0 %v400
        %421 = vmatpush1.msra.mxu0 %v399
        %422 = vmatprep.subr.mxu0 %v402
        %423 = vmatpush1.msra.mxu0 %v401
        %424 = vmatprep.subr.mxu0 %v404
        %425 = vmatpush1.msra.mxu0 %v403
        %426 = vmatprep.subr.mxu0 %v406
        %427 = vmatpush1.msra.mxu0 %v405
        %428 = vmatprep.subr.mxu0 %v408
        %429 = vmatpush1.msra.mxu0 %v407
        %430 = vmatprep.subr.mxu0 0.0
        %431 = vmatpush1.msra.mxu0 0.0
        %432 = vmatprep.subr.mxu0 0.0
        %433 = vmatpush1.msra.mxu0 0.0
        %434 = vmatprep.subr.mxu0 0.0
        %435 = vmatpush1.msra.mxu0 0.0
        %436 = vmatprep.subr.mxu0 0.0
        %437 = vmatpush1.msra.mxu0 0.0
        %438 = vmatprep.subr.mxu0 0.0
        %439 = vmatpush1.msra.mxu0 0.0
        %440 = vmatprep.subr.mxu0 0.0
        %441 = vmatpush1.msra.mxu0 0.0
        %442 = vmatprep.subr.mxu0 0.0
        %443 = vmatpush1.msra.mxu0 0.0
        %444 = vmatprep.subr.mxu0 0.0
        %445 = vmatpush1.msra.mxu0 0.0
        %446 = vmatprep.subr.mxu0 0.0
        %447 = vmatpush1.msra.mxu0 0.0
        %448 = vmatprep.subr.mxu0 0.0
        %449 = vmatpush1.msra.mxu0 0.0
        %450 = vmatprep.subr.mxu0 0.0
        %451 = vmatpush1.msra.mxu0 0.0
        %452 = vmatprep.subr.mxu0 0.0
        %453 = vmatpush1.msra.mxu0 0.0
        %454 = vmatprep.subr.mxu0 0.0
        %455 = vmatpush1.msra.mxu0 0.0
        %456 = vmatprep.subr.mxu0 0.0
        %457 = vmatpush1.msra.mxu0 0.0
        %458 = vmatprep.subr.mxu0 0.0
        %459 = vmatpush1.msra.mxu0 0.0
        %460 = vmatprep.subr.mxu0 0.0
        %461 = vmatpush1.msra.mxu0 0.0
        %462 = vmatprep.subr.mxu0 0.0
        %463 = vmatpush1.msra.mxu0 0.0
        %464 = vmatprep.subr.mxu0 0.0
        %465 = vmatpush1.msra.mxu0 0.0
        %466 = vmatprep.subr.mxu0 0.0
        %467 = vmatpush1.msra.mxu0 0.0
        %468 = vmatprep.subr.mxu0 0.0
        %469 = vmatpush1.msra.mxu0 0.0
        %470 = vmatprep.subr.mxu0 0.0
        %471 = vmatpush1.msra.mxu0 0.0
        %472 = vmatprep.subr.mxu0 0.0
        %473 = vmatpush1.msra.mxu0 0.0
        %474 = vmatprep.subr.mxu0 0.0
        %475 = vmatpush1.msra.mxu0 0.0
        %476 = vmatprep.subr.mxu0 0.0
        %477 = vmatpush1.msra.mxu0 0.0
        %478 = vmatprep.subr.mxu0 0.0
        %479 = vmatpush1.msra.mxu0 0.0
        %480 = vmatprep.subr.mxu0 0.0
        %481 = vmatpush1.msra.mxu0 0.0
        %482 = vmatprep.subr.mxu0 0.0
        %483 = vmatpush1.msra.mxu0 0.0
        %484 = vmatprep.mubr.f32.mxu0 0.0
        %485 = vmatmul.mubr.f32.gmra.mrb[0].mxu0 %v418
        %v486 = vpop.f32.mrb[0].mxu0
        %v487 = vadd.f32 %v414, %v486
        %v488 = vpop.f32.mrb[0].mxu0
        %v489 = vadd.f32 %v414, %v488
        %490 = vdwg.mxu0
        %vm491 = vcmp.eq.s32.totalorder %v257, 0
        %vm492 = vcmp.eq.s32.totalorder %v258, 0
        %v493 = vsel %vm491, 1, 0
        %v494 = vsel %vm492, 1, 0
        %vm495 = vcmp.eq.s32.totalorder %v493, 1
        %vm496 = vcmp.eq.s32.totalorder %v494, 1
        %v497 = vsel %vm495, %v487, 0.0
        %v498 = vsel %vm496, %v489, 0.0
        %v499 = vadd.f32 %v497, 0.0
        %v500 = vadd.f32 %v498, 0.0
        %s501 = scalar_lea.vmem %s1, 8
        %v502 = vld [vmem:[%s501] sm:$0xff]
        %s503 = scalar_lea.vmem %s2, 8
        %v504 = vld [vmem:[%s503] sm:$0xff]
        %506 = vset.pattern.permute.xlu0 0
        %507 = vperm.xlu0 %506, %v504
        %v508 = vpop.permute.xlu0 %507
        %v511 = vsel %vm416, %v502, 0
        %513 = vmatprep.subr.mxu0 %v400
        %514 = vmatpush1.msra.mxu0 %v399
        %515 = vmatprep.subr.mxu0 %v402
        %516 = vmatpush1.msra.mxu0 %v401
        %517 = vmatprep.subr.mxu0 %v404
        %518 = vmatpush1.msra.mxu0 %v403
        %519 = vmatprep.subr.mxu0 %v406
        %520 = vmatpush1.msra.mxu0 %v405
        %521 = vmatprep.subr.mxu0 %v408
        %522 = vmatpush1.msra.mxu0 %v407
        %523 = vmatprep.subr.mxu0 0.0
        %524 = vmatpush1.msra.mxu0 0.0
        %525 = vmatprep.subr.mxu0 0.0
        %526 = vmatpush1.msra.mxu0 0.0
        %527 = vmatprep.subr.mxu0 0.0
        %528 = vmatpush1.msra.mxu0 0.0
        %529 = vmatprep.subr.mxu0 0.0
        %530 = vmatpush1.msra.mxu0 0.0
        %531 = vmatprep.subr.mxu0 0.0
        %532 = vmatpush1.msra.mxu0 0.0
        %533 = vmatprep.subr.mxu0 0.0
        %534 = vmatpush1.msra.mxu0 0.0
        %535 = vmatprep.subr.mxu0 0.0
        %536 = vmatpush1.msra.mxu0 0.0
        %537 = vmatprep.subr.mxu0 0.0
        %538 = vmatpush1.msra.mxu0 0.0
        %539 = vmatprep.subr.mxu0 0.0
        %540 = vmatpush1.msra.mxu0 0.0
        %541 = vmatprep.subr.mxu0 0.0
        %542 = vmatpush1.msra.mxu0 0.0
        %543 = vmatprep.subr.mxu0 0.0
        %544 = vmatpush1.msra.mxu0 0.0
        %545 = vmatprep.subr.mxu0 0.0
        %546 = vmatpush1.msra.mxu0 0.0
        %547 = vmatprep.subr.mxu0 0.0
        %548 = vmatpush1.msra.mxu0 0.0
        %549 = vmatprep.subr.mxu0 0.0
        %550 = vmatpush1.msra.mxu0 0.0
        %551 = vmatprep.subr.mxu0 0.0
        %552 = vmatpush1.msra.mxu0 0.0
        %553 = vmatprep.subr.mxu0 0.0
        %554 = vmatpush1.msra.mxu0 0.0
        %555 = vmatprep.subr.mxu0 0.0
        %556 = vmatpush1.msra.mxu0 0.0
        %557 = vmatprep.subr.mxu0 0.0
        %558 = vmatpush1.msra.mxu0 0.0
        %559 = vmatprep.subr.mxu0 0.0
        %560 = vmatpush1.msra.mxu0 0.0
        %561 = vmatprep.subr.mxu0 0.0
        %562 = vmatpush1.msra.mxu0 0.0
        %563 = vmatprep.subr.mxu0 0.0
        %564 = vmatpush1.msra.mxu0 0.0
        %565 = vmatprep.subr.mxu0 0.0
        %566 = vmatpush1.msra.mxu0 0.0
        %567 = vmatprep.subr.mxu0 0.0
        %568 = vmatpush1.msra.mxu0 0.0
        %569 = vmatprep.subr.mxu0 0.0
        %570 = vmatpush1.msra.mxu0 0.0
        %571 = vmatprep.subr.mxu0 0.0
        %572 = vmatpush1.msra.mxu0 0.0
        %573 = vmatprep.subr.mxu0 0.0
        %574 = vmatpush1.msra.mxu0 0.0
        %575 = vmatprep.subr.mxu0 0.0
        %576 = vmatpush1.msra.mxu0 0.0
        %577 = vmatprep.mubr.f32.mxu0 0.0
        %578 = vmatmul.mubr.f32.gmra.mrb[0].mxu0 %v511
        %v579 = vpop.f32.mrb[0].mxu0
        %v580 = vadd.f32 %v508, %v579
        %v581 = vpop.f32.mrb[0].mxu0
        %v582 = vadd.f32 %v508, %v581
        %583 = vdwg.mxu0
        %vm584 = vcmp.eq.s32.totalorder %v257, 1
        %vm585 = vcmp.eq.s32.totalorder %v258, 1
        %v586 = vsel %vm584, 1, 0
        %v587 = vsel %vm585, 1, 0
        %vm588 = vcmp.eq.s32.totalorder %v586, 1
        %vm589 = vcmp.eq.s32.totalorder %v587, 1
        %v590 = vsel %vm588, %v580, 0.0
        %v591 = vsel %vm589, %v582, 0.0
        %v592 = vadd.f32 %v499, %v590
        %v593 = vadd.f32 %v500, %v591
        %v594 = vmin.f32 %v592, 20.0
        %v595 = vmin.f32 %v593, 20.0
        %v596 = vmul.f32 %v594, 1.442695
        %v597 = vpow.pop %v596
        %v598 = vmul.f32 %v595, 1.442695
        %v599 = vpow.pop %v598
        %v600 = vadd.f32 %v597, 2.0
        %v601 = vadd.f32 %v599, 2.0
        %v602 = vmul.f32 %v597, %v600
        %v603 = vmul.f32 %v599, %v601
        %vm604 = vcmp.gt.f32.partialorder %v592, 20.0
        %vm605 = vcmp.gt.f32.partialorder %v593, 20.0
        %v606 = vadd.f32 %v602, 2.0
        %v607 = vadd.f32 %v603, 2.0
        %v608 = vrcp.pop %v606
        %v609 = vrcp.pop %v607
        %v610 = vmul.f32 %v602, %v608
        %v611 = vmul.f32 %v603, %v609
        %v612 = vsel %vm604, 1.0, %v610
        %v613 = vsel %vm605, 1.0, %v611
        %v614 = vmul.f32 %v592, %v612
        %v615 = vmul.f32 %v593, %v613
        %vm616 = vcmask 257024
        %617 = vst.msk [vmem:[%s204] sm:$0xf] %vm616, %v614
        %619 = vrot.lane.b32.xlu0 %v614, 32
        %v620 = vpop.permute.xlu0 %619
        %vm622 = vcmask 781824
        %623 = vst.msk [vmem:[%s204] sm:$0xf] %vm622, %v620
        %624 = vrot.lane.b32.xlu0 %v614, 64
        %v625 = vpop.permute.xlu0 %624
        %627 = vst.msk [vmem:[%s204 + $0x4] sm:$0xf] %vm616, %v625
        %628 = vrot.lane.b32.xlu0 %v614, 96
        %v629 = vpop.permute.xlu0 %628
        %631 = vst.msk [vmem:[%s204 + $0x4] sm:$0xf] %vm622, %v629
        %632 = vst.msk [vmem:[%s204 + $0x8] sm:$0xf] %vm616, %v615
        %634 = vrot.lane.b32.xlu0 %v615, 32
        %v635 = vpop.permute.xlu0 %634
        %637 = vst.msk [vmem:[%s204 + $0x8] sm:$0xf] %vm622, %v635
        %638 = vrot.lane.b32.xlu0 %v615, 64
        %v639 = vpop.permute.xlu0 %638
        %641 = vst.msk [vmem:[%s204 + $0xc] sm:$0xf] %vm616, %v639
        %642 = vrot.lane.b32.xlu0 %v615, 96
        %v643 = vpop.permute.xlu0 %642
        %645 = vst.msk [vmem:[%s204 + $0xc] sm:$0xf] %vm622, %v643
        %v646 = vcombine.high %v614, %v614
        %647 = vrot.lane.b32.xlu0 %v646, 32
        %v648 = vpop.permute.xlu0 %647
        %vm650 = vcmask 519424
        %651 = vst.msk [vmem:[%s204] sm:$0xf] %vm650, %v648
        %652 = vrot.lane.b32.xlu0 %v646, 64
        %v653 = vpop.permute.xlu0 %652
        %vm655 = vcmask 1044224
        %656 = vst.msk [vmem:[%s204] sm:$0xf] %vm655, %v653
        %657 = vrot.lane.b32.xlu0 %v646, 96
        %v658 = vpop.permute.xlu0 %657
        %660 = vst.msk [vmem:[%s204 + $0x4] sm:$0xf] %vm650, %v658
        %662 = vst.msk [vmem:[%s204 + $0x4] sm:$0xf] %vm655, %v646
        %v663 = vcombine.high %v615, %v615
        %664 = vrot.lane.b32.xlu0 %v663, 32
        %v665 = vpop.permute.xlu0 %664
        %667 = vst.msk [vmem:[%s204 + $0x8] sm:$0xf] %vm650, %v665
        %668 = vrot.lane.b32.xlu0 %v663, 64
        %v669 = vpop.permute.xlu0 %668
        %671 = vst.msk [vmem:[%s204 + $0x8] sm:$0xf] %vm655, %v669
        %672 = vrot.lane.b32.xlu0 %v663, 96
        %v673 = vpop.permute.xlu0 %672
        %675 = vst.msk [vmem:[%s204 + $0xc] sm:$0xf] %vm650, %v673
        %677 = vst.msk [vmem:[%s204 + $0xc] sm:$0xf] %vm655, %v663
        %s678 = sand.u32 %s112, 1
        %s679 = scalar_lea.sflag [#allocation5], %s678
        %s680 = sand.u32 %s112, 1
        %s681 = smul.addr %s680, 16
        %s682 = scalar_lea.vmem [#allocation6], %s681
        // Predicated region
        $region37: #{tpu_custom_call.1} parent=31 // pred_check
          %p683 = pneg %p122
        $region38: #{tpu_custom_call.1} parent=31 // pred_check_branch
          %685 = sbr.rel (%p683) target = $region40
        $region39: #{tpu_custom_call.1} parent=31 // pred_region
          %s686 = smul.u32 4, %s25
          %s688 = ssub.s32 256, 256
          %689 = vsyncadd %s679, %s688
          %s690 = smul.addr %s24, 8
          %s691 = sadd.s32 %s686, %s690
          %s692 = smul.addr %s691, 64
          %s693 = scalar_lea.hbm %s3, %s692
          %s695 = sshll.u32 %s682, 4
          %s696 = int_to_ptr.vmem [resolvable:$true] %s695
          %698 = dma.vmem_to_hbm [thread:$0]  %s696, 256, %s693, %s679
        $region40: #{tpu_custom_call.1} parent=31 // pred_fallthru
          _
      $region32: #{tpu_custom_call.1} parent=5 // pred_fallthru
        _
      %p699 = scmp.le.s32.totalorder 2, %s15
      // Predicated region
      $region41: #{tpu_custom_call.1} parent=5 // pred_check
        %p700 = pneg %p699
      $region42: #{tpu_custom_call.1} parent=5 // pred_check_branch
        %702 = sbr.rel (%p700) target = $region44
      $region43: #{tpu_custom_call.1} parent=5 // pred_region
        %s703 = ssub.s32 %s15, 2
        // Predicated region
        $region45: #{tpu_custom_call.1} parent=43 // pred_check
          %p704 = pneg %p128
        $region46: #{tpu_custom_call.1} parent=43 // pred_check_branch
          %706 = sbr.rel (%p704) target = $region48
        $region47: #{tpu_custom_call.1} parent=43 // pred_region
          %s707 = sand.u32 %s113, 1
          %s708 = scalar_lea.sflag [#allocation5], %s707
          %s709 = sand.u32 %s113, 1
          %s710 = smul.addr %s709, 16
          %s711 = scalar_lea.vmem [#allocation6], %s710
          %712 = dma.done %s708, 256
        $region48: #{tpu_custom_call.1} parent=43 // pred_fallthru
          _
      $region44: #{tpu_custom_call.1} parent=5 // pred_fallthru
        _
    $region6: #{tpu_custom_call.1} parent=1 // loop_footer
      %s19 = sadd.s32 1, %s15
    $region7: #{tpu_custom_call.1} parent=1 // loop_footer_branch
      %14 = sbr.rel target = $region3
    $region8: #{tpu_custom_call.1} parent=1 // loop_exit
      _
    %713 = vsyncpa [#allocation4], 1
    %s714 = scalar_lea.sflag [#allocation4], 1
    %715 = vsyncpa %s714, 1
    %716 = vsyncpa [#allocation5], 1
    %s717 = scalar_lea.sflag [#allocation5], 1
    %718 = vsyncpa %s717, 1

</llo_original>
